<compile_context>
chip_gen: v7x
topology: tpu7x:2x2x1
jax: 0.10.0
libtpu: 0.0.40
codegen_flags: <defaults>
</compile_context>

<pallas_src>
import jax
import jax.numpy as jnp
from jax.experimental import pallas as pl
from jax.experimental.pallas import tpu as pltpu


def mlp_critic_kernel(x_ref, w1_ref, b1_ref, w2_ref, b2_ref, w3_ref, b3_ref,
                      o_ref):
    # fc1 + relu  (MXU matmul with f32 accumulation; bias/relu on the VPU)
    h1 = jnp.dot(x_ref[...], w1_ref[...], preferred_element_type=jnp.float32)
    h1 = jnp.maximum(h1 + b1_ref[...], 0.0)

    # fc2 + relu  (cast activations back to the weight dtype so a bf16 weight
    # path feeds the bf16 MXU; no-op for f32)
    h2 = jnp.dot(h1.astype(w2_ref.dtype), w2_ref[...],
                 preferred_element_type=jnp.float32)
    h2 = jnp.maximum(h2 + b2_ref[...], 0.0)

    # fc3 (value head, out_dim = 1): VPU multiply + cross-lane (XLU) reduce
    # instead of an MXU pass; result stored lane-dense as a [1, TILE_B] row.
    v = jnp.sum(h2 * w3_ref[...], axis=-1) + b3_ref[0]      # (TILE_B,)
    o_ref[...] = v[None, :].astype(o_ref.dtype)


def _round_up(x, m):
    return (x + m - 1) // m * m


def mlp_critic_forward(state, params, *, tile_b=512):
    """state: [B, input_dim] -> value: [B, 1] (matches the PyTorch module)."""
    w1, b1, w2, b2, w3_row, b3 = params
    B, in_dim = state.shape
    hidden = w1.shape[1]

    # Batch tile: multiple of 128 so the [1, TILE_B] output stores are
    # lane-dense; clamped so tiny batches do not over-pad.  512 rows keeps the
    # double-buffered state/output tiles tiny even against v7x's 64 MiB VMEM
    # while amortizing the ~0.35 us/step grid overhead.
    tile_b = min(tile_b, _round_up(B, 128))
    b_pad = _round_up(B, tile_b)
    if b_pad != B:
        state = jnp.pad(state, ((0, b_pad - B), (0, 0)))

    out = pl.pallas_call(
        mlp_critic_kernel,
        out_shape=jax.ShapeDtypeStruct((1, b_pad), state.dtype),
        grid_spec=pltpu.PrefetchScalarGridSpec(
            num_scalar_prefetch=0,
            grid=(b_pad // tile_b,),
            in_specs=[
                # state: tiled over batch rows (streamed / double-buffered).
                pl.BlockSpec((tile_b, in_dim), lambda i: (i, 0)),
                # weights & biases: constant block index -> copied once, resident.
                pl.BlockSpec((in_dim, hidden), lambda i: (0, 0)),   # w1
                pl.BlockSpec((1, hidden), lambda i: (0, 0)),        # b1
                pl.BlockSpec((hidden, hidden), lambda i: (0, 0)),   # w2
                pl.BlockSpec((1, hidden), lambda i: (0, 0)),        # b2
                pl.BlockSpec((1, hidden), lambda i: (0, 0)),        # w3 (row)
                # b3: scalar in SMEM (avoids an (8,128)-padded VMEM tile).
                pl.BlockSpec(memory_space=pltpu.MemorySpace.SMEM),
            ],
            out_specs=pl.BlockSpec((1, tile_b), lambda i: (0, i)),
        ),
        compiler_params=pltpu.CompilerParams(
            dimension_semantics=("parallel",)),   # dual-TC sharding on v7x
    )(state, w1, b1, w2, b2, w3_row, b3)

    return out[0, :B][:, None]


def init_params(key, input_dim, hidden_dim, dtype=jnp.float32):
    """Deterministic synthetic parameters.

    nn.Linear(in, out) stores weight as [out, in]; here fc1/fc2 are kept
    pre-transposed as [in, out] and fc3's weight as a [1, hidden] row (for the
    VPU reduction).  b3 is a (1,) f32 SMEM scalar.
    """
    ks = jax.random.split(key, 6)
    w1 = jax.random.normal(ks[0], (input_dim, hidden_dim), dtype) * 0.1
    b1 = jax.random.normal(ks[1], (1, hidden_dim), dtype) * 0.1
    w2 = jax.random.normal(ks[2], (hidden_dim, hidden_dim), dtype) * 0.1
    b2 = jax.random.normal(ks[3], (1, hidden_dim), dtype) * 0.1
    w3_row = jax.random.normal(ks[4], (1, hidden_dim), dtype) * 0.1
    b3 = jax.random.normal(ks[5], (1,), jnp.float32) * 0.1
    return (w1, b1, w2, b2, w3_row, b3)


def reference_forward(state, params):
    """Pure-JAX reference for correctness check."""
    w1, b1, w2, b2, w3_row, b3 = params
    h1 = jnp.maximum(state @ w1 + b1, 0.0)
    h2 = jnp.maximum(h1 @ w2 + b2, 0.0)
    return h2 @ w3_row.T + b3


if __name__ == "__main__":
    key = jax.random.PRNGKey(0)
    k_state, k_params = jax.random.split(key)

    batch = 2
    input_dim = 16
    hidden_dim = 32

    state = jax.random.normal(k_state, (batch, input_dim), jnp.float32)
    params = init_params(k_params, input_dim, hidden_dim)

    value = jax.block_until_ready(mlp_critic_forward(state, params))
    ref = reference_forward(state, params)

    assert value.shape == (batch, 1), value.shape
    assert jnp.allclose(value, ref, atol=1e-5, rtol=1e-5), (value, ref)

    print("KERNEL_OK")
</pallas_src>

<mosaic_0001>
module attributes {stable_mosaic.version = 11 : i64} {
  func.func @mlp_critic_kernel(%arg0: i32, %arg1: memref<128x16xf32, #tpu.memory_space<vmem>>, %arg2: memref<16x32xf32, #tpu.memory_space<vmem>>, %arg3: memref<1x32xf32, #tpu.memory_space<vmem>>, %arg4: memref<32x32xf32, #tpu.memory_space<vmem>>, %arg5: memref<1x32xf32, #tpu.memory_space<vmem>>, %arg6: memref<1x32xf32, #tpu.memory_space<vmem>>, %arg7: memref<1xf32, #tpu.memory_space<smem>>, %arg8: memref<1x128xf32, #tpu.memory_space<vmem>>) attributes {dimension_semantics = [#tpu.dimension_semantics<parallel>], iteration_bounds = array<i64: 1>, scalar_prefetch = 0 : i64, scratch_operands = 0 : i64, tpu.core_type = #tpu.core_type<tc>, window_params = [{transform_indices = @transform_0, window_bounds = array<i64: 128, 16>}, {pipeline_mode = #tpu.pipeline_mode<synchronous>, transform_indices = @transform_1, window_bounds = array<i64: 16, 32>}, {pipeline_mode = #tpu.pipeline_mode<synchronous>, transform_indices = @transform_2, window_bounds = array<i64: 1, 32>}, {pipeline_mode = #tpu.pipeline_mode<synchronous>, transform_indices = @transform_3, window_bounds = array<i64: 32, 32>}, {pipeline_mode = #tpu.pipeline_mode<synchronous>, transform_indices = @transform_4, window_bounds = array<i64: 1, 32>}, {pipeline_mode = #tpu.pipeline_mode<synchronous>, transform_indices = @transform_5, window_bounds = array<i64: 1, 32>}, {transform_indices = @transform_6, window_bounds = array<i64: 1>}, {transform_indices = @transform_7, window_bounds = array<i64: 1, 128>}]} {
    %c0 = arith.constant 0 : index
    %c0_0 = arith.constant 0 : index
    %0 = vector.load %arg1[%c0, %c0_0] : memref<128x16xf32, #tpu.memory_space<vmem>>, vector<128x16xf32>
    %c0_1 = arith.constant 0 : index
    %c0_2 = arith.constant 0 : index
    %1 = vector.load %arg2[%c0_1, %c0_2] : memref<16x32xf32, #tpu.memory_space<vmem>>, vector<16x32xf32>
    %cst = arith.constant dense<0.000000e+00> : vector<128x32xf32>
    %2 = tpu.matmul %0, %1, %cst {dimension_numbers = #tpu.dot_dimension_numbers<[1], [0], [0], [1], [0, 0, 1, 1], [], []>} : vector<128x16xf32>, vector<16x32xf32>, vector<128x32xf32> -> vector<128x32xf32>
    %c0_3 = arith.constant 0 : index
    %c0_4 = arith.constant 0 : index
    %3 = vector.load %arg3[%c0_3, %c0_4] : memref<1x32xf32, #tpu.memory_space<vmem>>, vector<1x32xf32>
    %4 = vector.broadcast %3 : vector<1x32xf32> to vector<128x32xf32>
    %5 = arith.addf %2, %4 : vector<128x32xf32>
    %cst_5 = arith.constant 0.000000e+00 : f32
    %6 = vector.broadcast %cst_5 : f32 to vector<128x32xf32>
    %7 = arith.maximumf %5, %6 : vector<128x32xf32>
    %c0_6 = arith.constant 0 : index
    %c0_7 = arith.constant 0 : index
    %8 = vector.load %arg4[%c0_6, %c0_7] : memref<32x32xf32, #tpu.memory_space<vmem>>, vector<32x32xf32>
    %cst_8 = arith.constant dense<0.000000e+00> : vector<128x32xf32>
    %9 = tpu.matmul %7, %8, %cst_8 {dimension_numbers = #tpu.dot_dimension_numbers<[1], [0], [0], [1], [0, 0, 1, 1], [], []>} : vector<128x32xf32>, vector<32x32xf32>, vector<128x32xf32> -> vector<128x32xf32>
    %c0_9 = arith.constant 0 : index
    %c0_10 = arith.constant 0 : index
    %10 = vector.load %arg5[%c0_9, %c0_10] : memref<1x32xf32, #tpu.memory_space<vmem>>, vector<1x32xf32>
    %11 = vector.broadcast %10 : vector<1x32xf32> to vector<128x32xf32>
    %12 = arith.addf %9, %11 : vector<128x32xf32>
    %cst_11 = arith.constant 0.000000e+00 : f32
    %13 = vector.broadcast %cst_11 : f32 to vector<128x32xf32>
    %14 = arith.maximumf %12, %13 : vector<128x32xf32>
    %c0_12 = arith.constant 0 : index
    %c0_13 = arith.constant 0 : index
    %15 = vector.load %arg6[%c0_12, %c0_13] : memref<1x32xf32, #tpu.memory_space<vmem>>, vector<1x32xf32>
    %16 = vector.broadcast %15 : vector<1x32xf32> to vector<128x32xf32>
    %17 = arith.mulf %14, %16 : vector<128x32xf32>
    %cst_14 = arith.constant dense<0.000000e+00> : vector<128xf32>
    %18 = vector.multi_reduction <add>, %17, %cst_14 [1] : vector<128x32xf32> to vector<128xf32>
    %c0_15 = arith.constant 0 : index
    %19 = memref.load %arg7[%c0_15] : memref<1xf32, #tpu.memory_space<smem>>
    %20 = vector.broadcast %19 : f32 to vector<128xf32>
    %21 = arith.addf %18, %20 : vector<128xf32>
    %22 = vector.shape_cast %21 : vector<128xf32> to vector<1x128xf32>
    %c0_16 = arith.constant 0 : index
    %c0_17 = arith.constant 0 : index
    %23 = vector.load %arg8[%c0_16, %c0_17] : memref<1x128xf32, #tpu.memory_space<vmem>>, vector<1x128xf32>
    tpu.vector_store %arg8[%c0_16, %c0_17], %22 {strides = array<i32>} : memref<1x128xf32, #tpu.memory_space<vmem>>, vector<1x128xf32>,
    return
  }
  func.func @transform_0(%arg0: i32) -> (i32, i32) {
    %c0_i32 = arith.constant 0 : i32
    %c0_i32_0 = arith.constant 0 : i32
    return %arg0, %c0_i32 : i32, i32
  }
  func.func @transform_1(%arg0: i32) -> (i32, i32) {
    %c0_i32 = arith.constant 0 : i32
    %c0_i32_0 = arith.constant 0 : i32
    %c0_i32_1 = arith.constant 0 : i32
    return %c0_i32, %c0_i32_0 : i32, i32
  }
  func.func @transform_2(%arg0: i32) -> (i32, i32) {
    %c0_i32 = arith.constant 0 : i32
    %c0_i32_0 = arith.constant 0 : i32
    %c0_i32_1 = arith.constant 0 : i32
    return %c0_i32, %c0_i32_0 : i32, i32
  }
  func.func @transform_3(%arg0: i32) -> (i32, i32) {
    %c0_i32 = arith.constant 0 : i32
    %c0_i32_0 = arith.constant 0 : i32
    %c0_i32_1 = arith.constant 0 : i32
    return %c0_i32, %c0_i32_0 : i32, i32
  }
  func.func @transform_4(%arg0: i32) -> (i32, i32) {
    %c0_i32 = arith.constant 0 : i32
    %c0_i32_0 = arith.constant 0 : i32
    %c0_i32_1 = arith.constant 0 : i32
    return %c0_i32, %c0_i32_0 : i32, i32
  }
  func.func @transform_5(%arg0: i32) -> (i32, i32) {
    %c0_i32 = arith.constant 0 : i32
    %c0_i32_0 = arith.constant 0 : i32
    %c0_i32_1 = arith.constant 0 : i32
    return %c0_i32, %c0_i32_0 : i32, i32
  }
  func.func @transform_6(%arg0: i32) -> i32 {
    %c0_i32 = arith.constant 0 : i32
    %c0_i32_0 = arith.constant 0 : i32
    return %c0_i32 : i32
  }
  func.func @transform_7(%arg0: i32) -> (i32, i32) {
    %c0_i32 = arith.constant 0 : i32
    %c0_i32_0 = arith.constant 0 : i32
    return %c0_i32, %arg0 : i32, i32
  }
}

</mosaic_0001>

<llo_original>
// kernel: tpu_custom_call.1
$region0: #{tpu_custom_call.1}
  #allocation0 [shape = 'u32[]', space=smem, size = 0x4, offset = 0x4, fixed_abs, tag = 'smem constant byte address 0x4 - core index']
  #allocation1 [shape = 'u32[144,128]{1,0:T(1,128)}', space=vmem, size = 0x12000, scoped, tag = 'internal scratch']
  #allocation2 [shape = 'f32[1]{0:T(128)S(6)}', space=smem, size = 0x200, scoped, tag = 'scoped memory for tpu_custom_call.1']
  %s0 = inlined_call_operand.vmem [shape: f32[128,16], index: 0, kind: input, shape index: {}]
  %s1 = inlined_call_operand.vmem [shape: f32[16,32], index: 1, kind: input, shape index: {}]
  %s2 = inlined_call_operand.vmem [shape: f32[1,32], index: 2, kind: input, shape index: {}]
  %s3 = inlined_call_operand.vmem [shape: f32[32,32], index: 3, kind: input, shape index: {}]
  %s4 = inlined_call_operand.vmem [shape: f32[1,32], index: 4, kind: input, shape index: {}]
  %s5 = inlined_call_operand.vmem [shape: f32[1,32], index: 5, kind: input, shape index: {}]
  %s6 = inlined_call_operand.<no memory space> [shape: f32[1], index: 6, kind: input, shape index: {}]
  %s7 = inlined_call_operand.hbm [shape: f32[1,128], index: 7, kind: output, shape index: {}]
  %s8 = sld [smem:[#allocation0]]
  $region38: #{tpu_custom_call.1} parent=0
    _
  %s10 = ssub.s32 1, %s8
  %s11 = scalar_select 0, %s10, %s8
  %12 = sst [smem:[#allocation2]] %s6
  $region1: #{tpu_custom_call.1} parent=0
    #allocation3 [shape = 'u8[512]{0}', space=vmem, size = 0x400, scoped, tag = 'output window, operand 0, single buffered']
    #allocation4 [shape = 's32[1]{0}', space=sflag, size = 0x4, scoped, tag = 'scoped memory for tpu_custom_call.1']
    %13 = vsyncpa [#allocation4], 0
    // Predicated region
    $region2: #{tpu_custom_call.1} parent=1 // pred_check
      _
    $region3: #{tpu_custom_call.1} parent=1 // pred_check_branch
      %15 = sbr.rel (0) target = $region5
    $region4: #{tpu_custom_call.1} parent=1 // pred_region
      _
    $region5: #{tpu_custom_call.1} parent=1 // pred_fallthru
      _
    // Predicated region
    $region6: #{tpu_custom_call.1} parent=1 // pred_check
      _
    $region7: #{tpu_custom_call.1} parent=1 // pred_check_branch
      %17 = sbr.rel (0) target = $region9
    $region8: #{tpu_custom_call.1} parent=1 // pred_region
      _
    $region9: #{tpu_custom_call.1} parent=1 // pred_fallthru
      _
    // Predicated region
    $region10: #{tpu_custom_call.1} parent=1 // pred_check
      _
    $region11: #{tpu_custom_call.1} parent=1 // pred_check_branch
      %19 = sbr.rel (0) target = $region13
    $region12: #{tpu_custom_call.1} parent=1 // pred_region
      _
    $region13: #{tpu_custom_call.1} parent=1 // pred_fallthru
      _
    // Predicated region
    $region14: #{tpu_custom_call.1} parent=1 // pred_check
      _
    $region15: #{tpu_custom_call.1} parent=1 // pred_check_branch
      %21 = sbr.rel (0) target = $region17
    $region16: #{tpu_custom_call.1} parent=1 // pred_region
      _
    $region17: #{tpu_custom_call.1} parent=1 // pred_fallthru
      _
    // Predicated region
    $region18: #{tpu_custom_call.1} parent=1 // pred_check
      _
    $region19: #{tpu_custom_call.1} parent=1 // pred_check_branch
      %23 = sbr.rel (0) target = $region21
    $region20: #{tpu_custom_call.1} parent=1 // pred_region
      _
    $region21: #{tpu_custom_call.1} parent=1 // pred_fallthru
      _
    // Predicated region
    $region22: #{tpu_custom_call.1} parent=1 // pred_check
      _
    $region23: #{tpu_custom_call.1} parent=1 // pred_check_branch
      %25 = sbr.rel (0) target = $region25
    $region24: #{tpu_custom_call.1} parent=1 // pred_region
      _
    $region25: #{tpu_custom_call.1} parent=1 // pred_fallthru
      _
    // Predicated region
    $region26: #{tpu_custom_call.1} parent=1 // pred_check
      _
    $region27: #{tpu_custom_call.1} parent=1 // pred_check_branch
      %27 = sbr.rel (0) target = $region29
    $region28: #{tpu_custom_call.1} parent=1 // pred_region
      _
    $region29: #{tpu_custom_call.1} parent=1 // pred_fallthru
      _
    %v28 = vld [vmem:[%s0] sm:$0xff]
    %v29 = vld [vmem:[%s0 + $0x8] sm:$0xff]
    %v30 = vld [vmem:[%s0 + $0x10] sm:$0xff]
    %v31 = vld [vmem:[%s0 + $0x18] sm:$0xff]
    %v32 = vld [vmem:[%s0 + $0x20] sm:$0xff]
    %v33 = vld [vmem:[%s0 + $0x28] sm:$0xff]
    %v34 = vld [vmem:[%s0 + $0x30] sm:$0xff]
    %v35 = vld [vmem:[%s0 + $0x38] sm:$0xff]
    %v36 = vld [vmem:[%s0 + $0x40] sm:$0xff]
    %v37 = vld [vmem:[%s0 + $0x48] sm:$0xff]
    %v38 = vld [vmem:[%s0 + $0x50] sm:$0xff]
    %v39 = vld [vmem:[%s0 + $0x58] sm:$0xff]
    %v40 = vld [vmem:[%s0 + $0x60] sm:$0xff]
    %v41 = vld [vmem:[%s0 + $0x68] sm:$0xff]
    %v42 = vld [vmem:[%s0 + $0x70] sm:$0xff]
    %v43 = vld [vmem:[%s0 + $0x78] sm:$0xff]
    %v44 = vld [vmem:[%s1] sm:$0xff]
    %v45 = vld [vmem:[%s1 + $0x8] sm:$0xff]
    %v46 = vld [vmem:[%s2] sm:$0x1]
    %v48 = vlaneseq
    %v49 = vshrl.u32 %v48, 7
    %v50 = vsub.s32 0, %v49
    %v51 = vrot.slane %v46, %v50
    %vm53 = vcmask 130048
    %v55 = vsel %vm53, %v28, 0
    %v58 = vsel %vm53, %v29, 0
    %v61 = vsel %vm53, %v30, 0
    %v64 = vsel %vm53, %v31, 0
    %v67 = vsel %vm53, %v32, 0
    %v70 = vsel %vm53, %v33, 0
    %v73 = vsel %vm53, %v34, 0
    %v76 = vsel %vm53, %v35, 0
    %v79 = vsel %vm53, %v36, 0
    %v82 = vsel %vm53, %v37, 0
    %v85 = vsel %vm53, %v38, 0
    %v88 = vsel %vm53, %v39, 0
    %v91 = vsel %vm53, %v40, 0
    %v94 = vsel %vm53, %v41, 0
    %v97 = vsel %vm53, %v42, 0
    %v100 = vsel %vm53, %v43, 0
    %102 = vmatprep.subr.mxu0 0.0
    %103 = vmatpush1.msra.mxu0 %v44
    %104 = vmatprep.subr.mxu0 0.0
    %105 = vmatpush1.msra.mxu0 %v45
    %106 = vmatprep.subr.mxu0 0.0
    %107 = vmatpush1.msra.mxu0 0.0
    %108 = vmatprep.subr.mxu0 0.0
    %109 = vmatpush1.msra.mxu0 0.0
    %110 = vmatprep.subr.mxu0 0.0
    %111 = vmatpush1.msra.mxu0 0.0
    %112 = vmatprep.subr.mxu0 0.0
    %113 = vmatpush1.msra.mxu0 0.0
    %114 = vmatprep.subr.mxu0 0.0
    %115 = vmatpush1.msra.mxu0 0.0
    %116 = vmatprep.subr.mxu0 0.0
    %117 = vmatpush1.msra.mxu0 0.0
    %118 = vmatprep.subr.mxu0 0.0
    %119 = vmatpush1.msra.mxu0 0.0
    %120 = vmatprep.subr.mxu0 0.0
    %121 = vmatpush1.msra.mxu0 0.0
    %122 = vmatprep.subr.mxu0 0.0
    %123 = vmatpush1.msra.mxu0 0.0
    %124 = vmatprep.subr.mxu0 0.0
    %125 = vmatpush1.msra.mxu0 0.0
    %126 = vmatprep.subr.mxu0 0.0
    %127 = vmatpush1.msra.mxu0 0.0
    %128 = vmatprep.subr.mxu0 0.0
    %129 = vmatpush1.msra.mxu0 0.0
    %130 = vmatprep.subr.mxu0 0.0
    %131 = vmatpush1.msra.mxu0 0.0
    %132 = vmatprep.subr.mxu0 0.0
    %133 = vmatpush1.msra.mxu0 0.0
    %134 = vmatprep.subr.mxu0 0.0
    %135 = vmatpush1.msra.mxu0 0.0
    %136 = vmatprep.subr.mxu0 0.0
    %137 = vmatpush1.msra.mxu0 0.0
    %138 = vmatprep.subr.mxu0 0.0
    %139 = vmatpush1.msra.mxu0 0.0
    %140 = vmatprep.subr.mxu0 0.0
    %141 = vmatpush1.msra.mxu0 0.0
    %142 = vmatprep.subr.mxu0 0.0
    %143 = vmatpush1.msra.mxu0 0.0
    %144 = vmatprep.subr.mxu0 0.0
    %145 = vmatpush1.msra.mxu0 0.0
    %146 = vmatprep.subr.mxu0 0.0
    %147 = vmatpush1.msra.mxu0 0.0
    %148 = vmatprep.subr.mxu0 0.0
    %149 = vmatpush1.msra.mxu0 0.0
    %150 = vmatprep.subr.mxu0 0.0
    %151 = vmatpush1.msra.mxu0 0.0
    %152 = vmatprep.subr.mxu0 0.0
    %153 = vmatpush1.msra.mxu0 0.0
    %154 = vmatprep.subr.mxu0 0.0
    %155 = vmatpush1.msra.mxu0 0.0
    %156 = vmatprep.subr.mxu0 0.0
    %157 = vmatpush1.msra.mxu0 0.0
    %158 = vmatprep.subr.mxu0 0.0
    %159 = vmatpush1.msra.mxu0 0.0
    %160 = vmatprep.subr.mxu0 0.0
    %161 = vmatpush1.msra.mxu0 0.0
    %162 = vmatprep.subr.mxu0 0.0
    %163 = vmatpush1.msra.mxu0 0.0
    %164 = vmatprep.subr.mxu0 0.0
    %165 = vmatpush1.msra.mxu0 0.0
    %166 = vmatprep.mubr.f32.mxu0 0.0
    %167 = vmatmul.mubr.f32.gmra.mrb[0].mxu0 %v55
    %v168 = vpop.f32.mrb[0].mxu0
    %v169 = vadd.f32 %v51, %v168
    %v170 = vpop.f32.mrb[0].mxu0
    %171 = vmatprep.mubr.f32.mxu0 0.0
    %172 = vmatmul.mubr.f32.gmra.mrb[0].mxu0 %v58
    %v173 = vpop.f32.mrb[0].mxu0
    %v174 = vadd.f32 %v51, %v173
    %v175 = vpop.f32.mrb[0].mxu0
    %176 = vmatprep.mubr.f32.mxu0 0.0
    %177 = vmatmul.mubr.f32.gmra.mrb[0].mxu0 %v61
    %v178 = vpop.f32.mrb[0].mxu0
    %v179 = vadd.f32 %v51, %v178
    %v180 = vpop.f32.mrb[0].mxu0
    %181 = vmatprep.mubr.f32.mxu0 0.0
    %182 = vmatmul.mubr.f32.gmra.mrb[0].mxu0 %v64
    %v183 = vpop.f32.mrb[0].mxu0
    %v184 = vadd.f32 %v51, %v183
    %v185 = vpop.f32.mrb[0].mxu0
    %186 = vmatprep.mubr.f32.mxu0 0.0
    %187 = vmatmul.mubr.f32.gmra.mrb[0].mxu0 %v67
    %v188 = vpop.f32.mrb[0].mxu0
    %v189 = vadd.f32 %v51, %v188
    %v190 = vpop.f32.mrb[0].mxu0
    %191 = vmatprep.mubr.f32.mxu0 0.0
    %192 = vmatmul.mubr.f32.gmra.mrb[0].mxu0 %v70
    %v193 = vpop.f32.mrb[0].mxu0
    %v194 = vadd.f32 %v51, %v193
    %v195 = vpop.f32.mrb[0].mxu0
    %196 = vmatprep.mubr.f32.mxu0 0.0
    %197 = vmatmul.mubr.f32.gmra.mrb[0].mxu0 %v73
    %v198 = vpop.f32.mrb[0].mxu0
    %v199 = vadd.f32 %v51, %v198
    %v200 = vpop.f32.mrb[0].mxu0
    %201 = vmatprep.mubr.f32.mxu0 0.0
    %202 = vmatmul.mubr.f32.gmra.mrb[0].mxu0 %v76
    %v203 = vpop.f32.mrb[0].mxu0
    %v204 = vadd.f32 %v51, %v203
    %v205 = vpop.f32.mrb[0].mxu0
    %206 = vmatprep.mubr.f32.mxu0 0.0
    %207 = vmatmul.mubr.f32.gmra.mrb[0].mxu0 %v79
    %v208 = vpop.f32.mrb[0].mxu0
    %v209 = vadd.f32 %v51, %v208
    %v210 = vpop.f32.mrb[0].mxu0
    %211 = vmatprep.mubr.f32.mxu0 0.0
    %212 = vmatmul.mubr.f32.gmra.mrb[0].mxu0 %v82
    %v213 = vpop.f32.mrb[0].mxu0
    %v214 = vadd.f32 %v51, %v213
    %v215 = vpop.f32.mrb[0].mxu0
    %216 = vmatprep.mubr.f32.mxu0 0.0
    %217 = vmatmul.mubr.f32.gmra.mrb[0].mxu0 %v85
    %v218 = vpop.f32.mrb[0].mxu0
    %v219 = vadd.f32 %v51, %v218
    %v220 = vpop.f32.mrb[0].mxu0
    %221 = vmatprep.mubr.f32.mxu0 0.0
    %222 = vmatmul.mubr.f32.gmra.mrb[0].mxu0 %v88
    %v223 = vpop.f32.mrb[0].mxu0
    %v224 = vadd.f32 %v51, %v223
    %v225 = vpop.f32.mrb[0].mxu0
    %226 = vmatprep.mubr.f32.mxu0 0.0
    %227 = vmatmul.mubr.f32.gmra.mrb[0].mxu0 %v91
    %v228 = vpop.f32.mrb[0].mxu0
    %v229 = vadd.f32 %v51, %v228
    %v230 = vpop.f32.mrb[0].mxu0
    %231 = vmatprep.mubr.f32.mxu0 0.0
    %232 = vmatmul.mubr.f32.gmra.mrb[0].mxu0 %v94
    %v233 = vpop.f32.mrb[0].mxu0
    %v234 = vadd.f32 %v51, %v233
    %v235 = vpop.f32.mrb[0].mxu0
    %236 = vmatprep.mubr.f32.mxu0 0.0
    %237 = vmatmul.mubr.f32.gmra.mrb[0].mxu0 %v97
    %v238 = vpop.f32.mrb[0].mxu0
    %v239 = vadd.f32 %v51, %v238
    %v240 = vpop.f32.mrb[0].mxu0
    %241 = vmatprep.mubr.f32.mxu0 0.0
    %242 = vmatmul.mubr.f32.gmra.mrb[0].mxu0 %v100
    %v243 = vpop.f32.mrb[0].mxu0
    %v244 = vadd.f32 %v51, %v243
    %v245 = vpop.f32.mrb[0].mxu0
    %246 = vdwg.mxu0
    %v247 = vmax.f32 %v169, 0.0
    %v248 = vmax.f32 %v174, 0.0
    %v249 = vmax.f32 %v179, 0.0
    %v250 = vmax.f32 %v184, 0.0
    %v251 = vmax.f32 %v189, 0.0
    %v252 = vmax.f32 %v194, 0.0
    %v253 = vmax.f32 %v199, 0.0
    %v254 = vmax.f32 %v204, 0.0
    %v255 = vmax.f32 %v209, 0.0
    %v256 = vmax.f32 %v214, 0.0
    %v257 = vmax.f32 %v219, 0.0
    %v258 = vmax.f32 %v224, 0.0
    %v259 = vmax.f32 %v229, 0.0
    %v260 = vmax.f32 %v234, 0.0
    %v261 = vmax.f32 %v239, 0.0
    %v262 = vmax.f32 %v244, 0.0
    %v263 = vld [vmem:[%s3] sm:$0xff]
    %v264 = vld [vmem:[%s3 + $0x8] sm:$0xff]
    %v265 = vld [vmem:[%s3 + $0x10] sm:$0xff]
    %v266 = vld [vmem:[%s3 + $0x18] sm:$0xff]
    %v267 = vld [vmem:[%s4] sm:$0x1]
    %v269 = vlaneseq
    %v270 = vshrl.u32 %v269, 7
    %v271 = vsub.s32 0, %v270
    %v272 = vrot.slane %v267, %v271
    %vm274 = vcmask 261120
    %v276 = vsel %vm274, %v247, 0
    %v279 = vsel %vm274, %v248, 0
    %v282 = vsel %vm274, %v249, 0
    %v285 = vsel %vm274, %v250, 0
    %v288 = vsel %vm274, %v251, 0
    %v291 = vsel %vm274, %v252, 0
    %v294 = vsel %vm274, %v253, 0
    %v297 = vsel %vm274, %v254, 0
    %v300 = vsel %vm274, %v255, 0
    %v303 = vsel %vm274, %v256, 0
    %v306 = vsel %vm274, %v257, 0
    %v309 = vsel %vm274, %v258, 0
    %v312 = vsel %vm274, %v259, 0
    %v315 = vsel %vm274, %v260, 0
    %v318 = vsel %vm274, %v261, 0
    %v321 = vsel %vm274, %v262, 0
    %323 = vmatprep.subr.mxu0 0.0
    %324 = vmatpush1.msra.mxu0 %v263
    %325 = vmatprep.subr.mxu0 0.0
    %326 = vmatpush1.msra.mxu0 %v264
    %327 = vmatprep.subr.mxu0 0.0
    %328 = vmatpush1.msra.mxu0 %v265
    %329 = vmatprep.subr.mxu0 0.0
    %330 = vmatpush1.msra.mxu0 %v266
    %331 = vmatprep.subr.mxu0 0.0
    %332 = vmatpush1.msra.mxu0 0.0
    %333 = vmatprep.subr.mxu0 0.0
    %334 = vmatpush1.msra.mxu0 0.0
    %335 = vmatprep.subr.mxu0 0.0
    %336 = vmatpush1.msra.mxu0 0.0
    %337 = vmatprep.subr.mxu0 0.0
    %338 = vmatpush1.msra.mxu0 0.0
    %339 = vmatprep.subr.mxu0 0.0
    %340 = vmatpush1.msra.mxu0 0.0
    %341 = vmatprep.subr.mxu0 0.0
    %342 = vmatpush1.msra.mxu0 0.0
    %343 = vmatprep.subr.mxu0 0.0
    %344 = vmatpush1.msra.mxu0 0.0
    %345 = vmatprep.subr.mxu0 0.0
    %346 = vmatpush1.msra.mxu0 0.0
    %347 = vmatprep.subr.mxu0 0.0
    %348 = vmatpush1.msra.mxu0 0.0
    %349 = vmatprep.subr.mxu0 0.0
    %350 = vmatpush1.msra.mxu0 0.0
    %351 = vmatprep.subr.mxu0 0.0
    %352 = vmatpush1.msra.mxu0 0.0
    %353 = vmatprep.subr.mxu0 0.0
    %354 = vmatpush1.msra.mxu0 0.0
    %355 = vmatprep.subr.mxu0 0.0
    %356 = vmatpush1.msra.mxu0 0.0
    %357 = vmatprep.subr.mxu0 0.0
    %358 = vmatpush1.msra.mxu0 0.0
    %359 = vmatprep.subr.mxu0 0.0
    %360 = vmatpush1.msra.mxu0 0.0
    %361 = vmatprep.subr.mxu0 0.0
    %362 = vmatpush1.msra.mxu0 0.0
    %363 = vmatprep.subr.mxu0 0.0
    %364 = vmatpush1.msra.mxu0 0.0
    %365 = vmatprep.subr.mxu0 0.0
    %366 = vmatpush1.msra.mxu0 0.0
    %367 = vmatprep.subr.mxu0 0.0
    %368 = vmatpush1.msra.mxu0 0.0
    %369 = vmatprep.subr.mxu0 0.0
    %370 = vmatpush1.msra.mxu0 0.0
    %371 = vmatprep.subr.mxu0 0.0
    %372 = vmatpush1.msra.mxu0 0.0
    %373 = vmatprep.subr.mxu0 0.0
    %374 = vmatpush1.msra.mxu0 0.0
    %375 = vmatprep.subr.mxu0 0.0
    %376 = vmatpush1.msra.mxu0 0.0
    %377 = vmatprep.subr.mxu0 0.0
    %378 = vmatpush1.msra.mxu0 0.0
    %379 = vmatprep.subr.mxu0 0.0
    %380 = vmatpush1.msra.mxu0 0.0
    %381 = vmatprep.subr.mxu0 0.0
    %382 = vmatpush1.msra.mxu0 0.0
    %383 = vmatprep.subr.mxu0 0.0
    %384 = vmatpush1.msra.mxu0 0.0
    %385 = vmatprep.subr.mxu0 0.0
    %386 = vmatpush1.msra.mxu0 0.0
    %387 = vmatprep.mubr.f32.mxu0 0.0
    %388 = vmatmul.mubr.f32.gmra.mrb[0].mxu0 %v276
    %v389 = vpop.f32.mrb[0].mxu0
    %v390 = vadd.f32 %v272, %v389
    %v391 = vpop.f32.mrb[0].mxu0
    %392 = vmatprep.mubr.f32.mxu0 0.0
    %393 = vmatmul.mubr.f32.gmra.mrb[0].mxu0 %v279
    %v394 = vpop.f32.mrb[0].mxu0
    %v395 = vadd.f32 %v272, %v394
    %v396 = vpop.f32.mrb[0].mxu0
    %397 = vmatprep.mubr.f32.mxu0 0.0
    %398 = vmatmul.mubr.f32.gmra.mrb[0].mxu0 %v282
    %v399 = vpop.f32.mrb[0].mxu0
    %v400 = vadd.f32 %v272, %v399
    %v401 = vpop.f32.mrb[0].mxu0
    %402 = vmatprep.mubr.f32.mxu0 0.0
    %403 = vmatmul.mubr.f32.gmra.mrb[0].mxu0 %v285
    %v404 = vpop.f32.mrb[0].mxu0
    %v405 = vadd.f32 %v272, %v404
    %v406 = vpop.f32.mrb[0].mxu0
    %407 = vmatprep.mubr.f32.mxu0 0.0
    %408 = vmatmul.mubr.f32.gmra.mrb[0].mxu0 %v288
    %v409 = vpop.f32.mrb[0].mxu0
    %v410 = vadd.f32 %v272, %v409
    %v411 = vpop.f32.mrb[0].mxu0
    %412 = vmatprep.mubr.f32.mxu0 0.0
    %413 = vmatmul.mubr.f32.gmra.mrb[0].mxu0 %v291
    %v414 = vpop.f32.mrb[0].mxu0
    %v415 = vadd.f32 %v272, %v414
    %v416 = vpop.f32.mrb[0].mxu0
    %417 = vmatprep.mubr.f32.mxu0 0.0
    %418 = vmatmul.mubr.f32.gmra.mrb[0].mxu0 %v294
    %v419 = vpop.f32.mrb[0].mxu0
    %v420 = vadd.f32 %v272, %v419
    %v421 = vpop.f32.mrb[0].mxu0
    %422 = vmatprep.mubr.f32.mxu0 0.0
    %423 = vmatmul.mubr.f32.gmra.mrb[0].mxu0 %v297
    %v424 = vpop.f32.mrb[0].mxu0
    %v425 = vadd.f32 %v272, %v424
    %v426 = vpop.f32.mrb[0].mxu0
    %427 = vmatprep.mubr.f32.mxu0 0.0
    %428 = vmatmul.mubr.f32.gmra.mrb[0].mxu0 %v300
    %v429 = vpop.f32.mrb[0].mxu0
    %v430 = vadd.f32 %v272, %v429
    %v431 = vpop.f32.mrb[0].mxu0
    %432 = vmatprep.mubr.f32.mxu0 0.0
    %433 = vmatmul.mubr.f32.gmra.mrb[0].mxu0 %v303
    %v434 = vpop.f32.mrb[0].mxu0
    %v435 = vadd.f32 %v272, %v434
    %v436 = vpop.f32.mrb[0].mxu0
    %437 = vmatprep.mubr.f32.mxu0 0.0
    %438 = vmatmul.mubr.f32.gmra.mrb[0].mxu0 %v306
    %v439 = vpop.f32.mrb[0].mxu0
    %v440 = vadd.f32 %v272, %v439
    %v441 = vpop.f32.mrb[0].mxu0
    %442 = vmatprep.mubr.f32.mxu0 0.0
    %443 = vmatmul.mubr.f32.gmra.mrb[0].mxu0 %v309
    %v444 = vpop.f32.mrb[0].mxu0
    %v445 = vadd.f32 %v272, %v444
    %v446 = vpop.f32.mrb[0].mxu0
    %447 = vmatprep.mubr.f32.mxu0 0.0
    %448 = vmatmul.mubr.f32.gmra.mrb[0].mxu0 %v312
    %v449 = vpop.f32.mrb[0].mxu0
    %v450 = vadd.f32 %v272, %v449
    %v451 = vpop.f32.mrb[0].mxu0
    %452 = vmatprep.mubr.f32.mxu0 0.0
    %453 = vmatmul.mubr.f32.gmra.mrb[0].mxu0 %v315
    %v454 = vpop.f32.mrb[0].mxu0
    %v455 = vadd.f32 %v272, %v454
    %v456 = vpop.f32.mrb[0].mxu0
    %457 = vmatprep.mubr.f32.mxu0 0.0
    %458 = vmatmul.mubr.f32.gmra.mrb[0].mxu0 %v318
    %v459 = vpop.f32.mrb[0].mxu0
    %v460 = vadd.f32 %v272, %v459
    %v461 = vpop.f32.mrb[0].mxu0
    %462 = vmatprep.mubr.f32.mxu0 0.0
    %463 = vmatmul.mubr.f32.gmra.mrb[0].mxu0 %v321
    %v464 = vpop.f32.mrb[0].mxu0
    %v465 = vadd.f32 %v272, %v464
    %v466 = vpop.f32.mrb[0].mxu0
    %467 = vdwg.mxu0
    %v468 = vmax.f32 %v390, 0.0
    %v469 = vmax.f32 %v395, 0.0
    %v470 = vmax.f32 %v400, 0.0
    %v471 = vmax.f32 %v405, 0.0
    %v472 = vmax.f32 %v410, 0.0
    %v473 = vmax.f32 %v415, 0.0
    %v474 = vmax.f32 %v420, 0.0
    %v475 = vmax.f32 %v425, 0.0
    %v476 = vmax.f32 %v430, 0.0
    %v477 = vmax.f32 %v435, 0.0
    %v478 = vmax.f32 %v440, 0.0
    %v479 = vmax.f32 %v445, 0.0
    %v480 = vmax.f32 %v450, 0.0
    %v481 = vmax.f32 %v455, 0.0
    %v482 = vmax.f32 %v460, 0.0
    %v483 = vmax.f32 %v465, 0.0
    %v484 = vld [vmem:[%s5] sm:$0x1]
    %v486 = vlaneseq
    %v487 = vshrl.u32 %v486, 7
    %v488 = vsub.s32 0, %v487
    %v489 = vrot.slane %v484, %v488
    %v491 = vmul.f32 %v468, %v489
    %v492 = vmul.f32 %v469, %v489
    %v493 = vmul.f32 %v470, %v489
    %v494 = vmul.f32 %v471, %v489
    %v495 = vmul.f32 %v472, %v489
    %v496 = vmul.f32 %v473, %v489
    %v497 = vmul.f32 %v474, %v489
    %v498 = vmul.f32 %v475, %v489
    %v499 = vmul.f32 %v476, %v489
    %v500 = vmul.f32 %v477, %v489
    %v501 = vmul.f32 %v478, %v489
    %v502 = vmul.f32 %v479, %v489
    %v503 = vmul.f32 %v480, %v489
    %v504 = vmul.f32 %v481, %v489
    %v505 = vmul.f32 %v482, %v489
    %v506 = vmul.f32 %v483, %v489
    %v507 = vsel %vm274, %v491, 0.0
    %508 = vadd.xlane.f32.xlu0 %v507
    %v509 = vpop.xlane.xlu0 %508
    %v510 = vsel %vm274, %v492, 0.0
    %511 = vadd.xlane.f32.xlu0 %v510
    %v512 = vpop.xlane.xlu0 %511
    %v513 = vsel %vm274, %v493, 0.0
    %514 = vadd.xlane.f32.xlu0 %v513
    %v515 = vpop.xlane.xlu0 %514
    %v516 = vsel %vm274, %v494, 0.0
    %517 = vadd.xlane.f32.xlu0 %v516
    %v518 = vpop.xlane.xlu0 %517
    %v519 = vsel %vm274, %v495, 0.0
    %520 = vadd.xlane.f32.xlu0 %v519
    %v521 = vpop.xlane.xlu0 %520
    %v522 = vsel %vm274, %v496, 0.0
    %523 = vadd.xlane.f32.xlu0 %v522
    %v524 = vpop.xlane.xlu0 %523
    %v525 = vsel %vm274, %v497, 0.0
    %526 = vadd.xlane.f32.xlu0 %v525
    %v527 = vpop.xlane.xlu0 %526
    %v528 = vsel %vm274, %v498, 0.0
    %529 = vadd.xlane.f32.xlu0 %v528
    %v530 = vpop.xlane.xlu0 %529
    %v531 = vsel %vm274, %v499, 0.0
    %532 = vadd.xlane.f32.xlu0 %v531
    %v533 = vpop.xlane.xlu0 %532
    %v534 = vsel %vm274, %v500, 0.0
    %535 = vadd.xlane.f32.xlu0 %v534
    %v536 = vpop.xlane.xlu0 %535
    %v537 = vsel %vm274, %v501, 0.0
    %538 = vadd.xlane.f32.xlu0 %v537
    %v539 = vpop.xlane.xlu0 %538
    %v540 = vsel %vm274, %v502, 0.0
    %541 = vadd.xlane.f32.xlu0 %v540
    %v542 = vpop.xlane.xlu0 %541
    %v543 = vsel %vm274, %v503, 0.0
    %544 = vadd.xlane.f32.xlu0 %v543
    %v545 = vpop.xlane.xlu0 %544
    %v546 = vsel %vm274, %v504, 0.0
    %547 = vadd.xlane.f32.xlu0 %v546
    %v548 = vpop.xlane.xlu0 %547
    %v549 = vsel %vm274, %v505, 0.0
    %550 = vadd.xlane.f32.xlu0 %v549
    %v551 = vpop.xlane.xlu0 %550
    %v552 = vsel %vm274, %v506, 0.0
    %553 = vadd.xlane.f32.xlu0 %v552
    %v554 = vpop.xlane.xlu0 %553
    %s555 = sld [smem:[#allocation2]]
    %v556 = vstv %s555
    %v557 = vadd.f32 %v509, %v556
    %v558 = vadd.f32 %v512, %v556
    %v559 = vadd.f32 %v515, %v556
    %v560 = vadd.f32 %v518, %v556
    %v561 = vadd.f32 %v521, %v556
    %v562 = vadd.f32 %v524, %v556
    %v563 = vadd.f32 %v527, %v556
    %v564 = vadd.f32 %v530, %v556
    %v565 = vadd.f32 %v533, %v556
    %v566 = vadd.f32 %v536, %v556
    %v567 = vadd.f32 %v539, %v556
    %v568 = vadd.f32 %v542, %v556
    %v569 = vadd.f32 %v545, %v556
    %v570 = vadd.f32 %v548, %v556
    %v571 = vadd.f32 %v551, %v556
    %v572 = vadd.f32 %v554, %v556
    %v589 = vlaneseq
    %v590 = vand.u32 %v589, 127
    %v591 = vlaneseq
    %v592 = vshrl.u32 %v591, 7
    %v593 = vsub.s32 %v590, %v592
    %v594 = vrot.slane %v557, %v593
    %v595 = vadd.s32 %v590, 4294967288
    %v596 = vlaneseq
    %v597 = vshrl.u32 %v596, 7
    %v598 = vsub.s32 %v595, %v597
    %v599 = vrot.slane %v558, %v598
    %vm600 = vcmask 130112
    %v601 = vsel %vm600, %v599, %v594
    %v602 = vadd.s32 %v590, 4294967280
    %v603 = vlaneseq
    %v604 = vshrl.u32 %v603, 7
    %v605 = vsub.s32 %v602, %v604
    %v606 = vrot.slane %v559, %v605
    %vm607 = vcmask 195712
    %v608 = vsel %vm607, %v606, %v601
    %v609 = vadd.s32 %v590, 4294967272
    %v610 = vlaneseq
    %v611 = vshrl.u32 %v610, 7
    %v612 = vsub.s32 %v609, %v611
    %v613 = vrot.slane %v560, %v612
    %vm614 = vcmask 261312
    %v615 = vsel %vm614, %v613, %v608
    %v616 = vadd.s32 %v590, 4294967264
    %v617 = vlaneseq
    %v618 = vshrl.u32 %v617, 7
    %v619 = vsub.s32 %v616, %v618
    %v620 = vrot.slane %v561, %v619
    %vm621 = vcmask 326912
    %v622 = vsel %vm621, %v620, %v615
    %v623 = vadd.s32 %v590, 4294967256
    %v624 = vlaneseq
    %v625 = vshrl.u32 %v624, 7
    %v626 = vsub.s32 %v623, %v625
    %v627 = vrot.slane %v562, %v626
    %vm628 = vcmask 392512
    %v629 = vsel %vm628, %v627, %v622
    %v630 = vadd.s32 %v590, 4294967248
    %v631 = vlaneseq
    %v632 = vshrl.u32 %v631, 7
    %v633 = vsub.s32 %v630, %v632
    %v634 = vrot.slane %v563, %v633
    %vm635 = vcmask 458112
    %v636 = vsel %vm635, %v634, %v629
    %v637 = vadd.s32 %v590, 4294967240
    %v638 = vlaneseq
    %v639 = vshrl.u32 %v638, 7
    %v640 = vsub.s32 %v637, %v639
    %v641 = vrot.slane %v564, %v640
    %vm642 = vcmask 523712
    %v643 = vsel %vm642, %v641, %v636
    %v644 = vadd.s32 %v590, 4294967232
    %v645 = vlaneseq
    %v646 = vshrl.u32 %v645, 7
    %v647 = vsub.s32 %v644, %v646
    %v648 = vrot.slane %v565, %v647
    %vm649 = vcmask 589312
    %v650 = vsel %vm649, %v648, %v643
    %v651 = vadd.s32 %v590, 4294967224
    %v652 = vlaneseq
    %v653 = vshrl.u32 %v652, 7
    %v654 = vsub.s32 %v651, %v653
    %v655 = vrot.slane %v566, %v654
    %vm656 = vcmask 654912
    %v657 = vsel %vm656, %v655, %v650
    %v658 = vadd.s32 %v590, 4294967216
    %v659 = vlaneseq
    %v660 = vshrl.u32 %v659, 7
    %v661 = vsub.s32 %v658, %v660
    %v662 = vrot.slane %v567, %v661
    %vm663 = vcmask 720512
    %v664 = vsel %vm663, %v662, %v657
    %v665 = vadd.s32 %v590, 4294967208
    %v666 = vlaneseq
    %v667 = vshrl.u32 %v666, 7
    %v668 = vsub.s32 %v665, %v667
    %v669 = vrot.slane %v568, %v668
    %vm670 = vcmask 786112
    %v671 = vsel %vm670, %v669, %v664
    %v672 = vadd.s32 %v590, 4294967200
    %v673 = vlaneseq
    %v674 = vshrl.u32 %v673, 7
    %v675 = vsub.s32 %v672, %v674
    %v676 = vrot.slane %v569, %v675
    %vm677 = vcmask 851712
    %v678 = vsel %vm677, %v676, %v671
    %v679 = vadd.s32 %v590, 4294967192
    %v680 = vlaneseq
    %v681 = vshrl.u32 %v680, 7
    %v682 = vsub.s32 %v679, %v681
    %v683 = vrot.slane %v570, %v682
    %vm684 = vcmask 917312
    %v685 = vsel %vm684, %v683, %v678
    %v686 = vadd.s32 %v590, 4294967184
    %v687 = vlaneseq
    %v688 = vshrl.u32 %v687, 7
    %v689 = vsub.s32 %v686, %v688
    %v690 = vrot.slane %v571, %v689
    %vm691 = vcmask 982912
    %v692 = vsel %vm691, %v690, %v685
    %v693 = vadd.s32 %v590, 4294967176
    %v694 = vlaneseq
    %v695 = vshrl.u32 %v694, 7
    %v696 = vsub.s32 %v693, %v695
    %v697 = vrot.slane %v572, %v696
    %vm698 = vcmask 1048512
    %v699 = vsel %vm698, %v697, %v692
    %701 = vst [vmem:[#allocation3] sm:$0x1] %v699
    // Predicated region
    $region30: #{tpu_custom_call.1} parent=1 // pred_check
      _
    $region31: #{tpu_custom_call.1} parent=1 // pred_check_branch
      %703 = sbr.rel (0) target = $region33
    $region32: #{tpu_custom_call.1} parent=1 // pred_region
      %s705 = ssub.s32 16, 16
      %706 = vsyncadd [#allocation4], %s705
      %s708 = sshll.u32 [#allocation3], 4
      %s709 = int_to_ptr.vmem [resolvable:$true] %s708
      %711 = dma.vmem_to_hbm [thread:$0]  %s709, 16, %s7, [#allocation4]
    $region33: #{tpu_custom_call.1} parent=1 // pred_fallthru
      _
    // Predicated region
    $region34: #{tpu_custom_call.1} parent=1 // pred_check
      _
    $region35: #{tpu_custom_call.1} parent=1 // pred_check_branch
      %713 = sbr.rel (0) target = $region37
    $region36: #{tpu_custom_call.1} parent=1 // pred_region
      %714 = dma.done [#allocation4], 16
    $region37: #{tpu_custom_call.1} parent=1 // pred_fallthru
      _
    %715 = vsyncpa [#allocation4], 1

</llo_original>
